<compile_context>
chip_gen: v7x
topology: tpu7x:2x2x1
jax: 0.10.0
libtpu: 0.0.40
codegen_flags: <defaults>
</compile_context>

<pallas_src>
import jax
import jax.numpy as jnp
from jax.experimental import pallas as pl
from jax.experimental.pallas import tpu as pltpu


def _round_up(x, m):
    return (x + m - 1) // m * m


def _custom_online_kernel(
    a_ref,            # SMEM [1, 1]    PReLU slope (single-parameter PReLU)
    x_ref,            # VMEM [TM, Fin] streamed input rows
    wcat_ref,         # VMEM [Fin, 2H] = [We | Wt]   (resident)
    bcat_ref,         # VMEM [1, 2H]   = [be | bt]   (f32, resident)
    w1_ref, b1_ref,   # predictor layer 1 (resident)
    w2_ref, b2_ref,   # predictor layer 2 (resident)
    h_ref,            # out [TM, H]  h        (online encoder)
    hpred_ref,        # out [TM, H]  h_pred   (predictor)
    ht_ref,           # out [TM, H]  h_target (target encoder)
):
    H = h_ref.shape[-1]
    # In-VMEM cast to the MXU dtype (no extra HBM traffic in the wrapper).
    x = x_ref[...].astype(wcat_ref.dtype)

    # ---- fused online + target encoder: one wide MXU pass on the shared x ------
    hcat = jnp.dot(x, wcat_ref[...], preferred_element_type=jnp.float32) + bcat_ref[...]
    h = hcat[:, :H]                                   # lane-aligned (H % 128 == 0)
    h_ref[...] = h.astype(h_ref.dtype)
    ht_ref[...] = hcat[:, H:].astype(ht_ref.dtype)

    # ---- predictor on the online half: Linear -> PReLU -> Linear ---------------
    z = jnp.dot(h.astype(w1_ref.dtype), w1_ref[...],
                preferred_element_type=jnp.float32) + b1_ref[...]
    a = a_ref[0, 0]                                   # scalar read from SMEM
    z = jnp.where(z >= 0, z, a * z)                   # PReLU in f32
    h_pred = jnp.dot(z.astype(w2_ref.dtype), w2_ref[...],
                     preferred_element_type=jnp.float32) + b2_ref[...]
    hpred_ref[...] = h_pred.astype(hpred_ref.dtype)


def prepare_params(params, compute_dtype=None):
    """One-time weight packing + casting (hoisted out of the per-call path).

    compute_dtype: optional matmul-weight dtype (jnp.bfloat16 recommended on
    v5e/v6e/v7x; the kernel is HBM-bound and the MXU runs bf16 at full rate).
    Biases, PReLU slope and MXU accumulation stay float32.
    """
    wdt = compute_dtype if compute_dtype is not None else params["we"].dtype
    wcat = jnp.concatenate([params["we"], params["wt"]], axis=1).astype(wdt)   # [Fin, 2H]
    bcat = jnp.concatenate([params["be"], params["bt"]], axis=1).astype(jnp.float32)
    return dict(
        wcat=wcat, bcat=bcat,
        w1=params["w1"].astype(wdt), b1=params["b1"].astype(jnp.float32),
        w2=params["w2"].astype(wdt), b2=params["b2"].astype(jnp.float32),
        prelu_a=params["prelu_a"].reshape(1, 1).astype(jnp.float32),
    )


def _vmem_cap_bytes():
    """Generation-aware VMEM cap (~80% of physical); safe fallback for all gens."""
    try:
        get_info = getattr(pltpu, "get_tpu_info", None)
        if get_info is not None:
            cap = getattr(get_info(), "vmem_capacity_bytes", None)
            if cap:
                return int(cap) * 4 // 5       # ~102 MiB v5e/v6e, ~51 MiB v7x
    except Exception:
        pass
    return 48 << 20                            # safe even on v7x (64 MiB physical)


def custom_online_forward(x, prepared, *, tm=512, out_dtype=None):
    """x: [N, Fin] (any float dtype; pass bf16 to halve input DMA).
    prepared: output of prepare_params().  Returns (h, h_pred, h_target)."""
    N, Fin = x.shape
    wcat, bcat = prepared["wcat"], prepared["bcat"]
    w1, b1 = prepared["w1"], prepared["b1"]
    w2, b2 = prepared["w2"], prepared["b2"]
    prelu_a = prepared["prelu_a"]
    H = w1.shape[0]

    if out_dtype is None:
        out_dtype = wcat.dtype                 # bf16 weights -> bf16 outputs
    out_isz = jnp.dtype(out_dtype).itemsize

    # ---- row-tile selection ------------------------------------------------------
    sub = 8 if (x.dtype.itemsize >= 4 and out_isz >= 4) else 16   # bf16 packs 16 rows
    vmem_cap = _vmem_cap_bytes()
    w_bytes = (wcat.size * wcat.dtype.itemsize
               + w1.size * w1.dtype.itemsize
               + w2.size * w2.dtype.itemsize
               + (bcat.size + b1.size + b2.size) * 4)
    # Resident weights counted once (constant index_maps); streamed x tile and the
    # three output tiles are double-buffered by the pipeline.
    per_row = 2 * (Fin * x.dtype.itemsize + 3 * H * out_isz)
    headroom = 4 << 20
    tm_budget = max(sub, (vmem_cap - w_bytes - headroom) // max(per_row, 1))
    tm = int(min(int(tm), tm_budget, _round_up(N, sub)))
    tm = max(sub, _round_up(tm, sub))

    # Even tile count so v7x's two TensorCores split the "parallel" axis evenly.
    grid_n = pl.cdiv(N, tm)
    if grid_n > 1 and grid_n % 2 == 1:
        tm = max(sub, _round_up(pl.cdiv(N, grid_n + 1), sub))
        grid_n = pl.cdiv(N, tm)

    vmem_need = w_bytes + tm * per_row + headroom
    vmem_limit = int(min(max(vmem_need, 32 << 20), vmem_cap))

    cost = pl.CostEstimate(
        flops=2 * N * (Fin * 2 * H + 2 * H * H),
        transcendentals=0,
        bytes_accessed=int(N * Fin * x.dtype.itemsize + w_bytes + N * 3 * H * out_isz),
    )

    h, h_pred, h_target = pl.pallas_call(
        _custom_online_kernel,
        out_shape=(
            jax.ShapeDtypeStruct((N, H), out_dtype),   # h
            jax.ShapeDtypeStruct((N, H), out_dtype),   # h_pred
            jax.ShapeDtypeStruct((N, H), out_dtype),   # h_target
        ),
        grid=(grid_n,),
        in_specs=[
            pl.BlockSpec(memory_space=pltpu.SMEM),               # PReLU slope (scalar path)
            pl.BlockSpec((tm, Fin), lambda i: (i, 0)),           # x: streamed row tiles
            pl.BlockSpec((Fin, 2 * H), lambda i: (0, 0)),        # Wcat: resident
            pl.BlockSpec((1, 2 * H), lambda i: (0, 0)),          # bcat: resident
            pl.BlockSpec((H, H), lambda i: (0, 0)),              # w1:  resident
            pl.BlockSpec((1, H), lambda i: (0, 0)),              # b1
            pl.BlockSpec((H, H), lambda i: (0, 0)),              # w2
            pl.BlockSpec((1, H), lambda i: (0, 0)),              # b2
        ],
        out_specs=(
            pl.BlockSpec((tm, H), lambda i: (i, 0)),
            pl.BlockSpec((tm, H), lambda i: (i, 0)),
            pl.BlockSpec((tm, H), lambda i: (i, 0)),
        ),
        compiler_params=pltpu.CompilerParams(
            dimension_semantics=("parallel",),                   # megacore on v7x
            vmem_limit_bytes=vmem_limit,
        ),
        cost_estimate=cost,
    )(prelu_a, x, wcat, bcat, w1, b1, w2, b2)

    # torch runs the target encoder under no_grad -> block gradients here.
    return h, h_pred, jax.lax.stop_gradient(h_target)


def init_params(key, in_dim, hidden_dim):
    """Deterministic synthetic parameters (shapes follow CustomOnline.__init__)."""
    ks = jax.random.split(key, 8)

    def lin(kw, kb, fan_in, fan_out):
        # PyTorch-style uniform(-1/sqrt(fan_in), 1/sqrt(fan_in)); stored as [in, out].
        bound = 1.0 / jnp.sqrt(jnp.float32(fan_in))
        w = jax.random.uniform(kw, (fan_in, fan_out), jnp.float32, -bound, bound)
        b = jax.random.uniform(kb, (1, fan_out), jnp.float32, -bound, bound)
        return w, b

    we, be = lin(ks[0], ks[1], in_dim, hidden_dim)      # online encoder (linear)
    wt, bt = lin(ks[2], ks[3], in_dim, hidden_dim)      # target encoder (linear)
    w1, b1 = lin(ks[4], ks[5], hidden_dim, hidden_dim)  # predictor layer 1
    w2, b2 = lin(ks[6], ks[7], hidden_dim, hidden_dim)  # predictor layer 2
    prelu_a = jnp.full((1, 1), 0.25, jnp.float32)       # nn.PReLU() default init

    return dict(we=we, be=be, wt=wt, bt=bt,
                w1=w1, b1=b1, w2=w2, b2=b2, prelu_a=prelu_a)


def _reference_forward(x, p):
    h = x @ p["we"] + p["be"]
    z = h @ p["w1"] + p["b1"]
    z = jnp.where(z >= 0, z, p["prelu_a"][0, 0] * z)
    h_pred = z @ p["w2"] + p["b2"]
    h_target = x @ p["wt"] + p["bt"]
    return h, h_pred, h_target


if __name__ == "__main__":
    # Small but lane-aligned shapes: H multiple of 128, N not a tile multiple
    # (exercises the partial-last-block path and the even-grid adjustment).
    N, IN_DIM, HIDDEN = 300, 128, 128

    key = jax.random.PRNGKey(0)
    kx, kp = jax.random.split(key)
    x = jax.random.normal(kx, (N, IN_DIM), jnp.float32)
    params = init_params(kp, IN_DIM, HIDDEN)
    h_r, hp_r, ht_r = _reference_forward(x, params)

    # float32 path, multi-tile grid: tight check against plain-JAX reference.
    prep_f32 = prepare_params(params)                       # hoisted weight packing
    h, h_pred, h_target = custom_online_forward(x, prep_f32, tm=128)
    jax.block_until_ready((h, h_pred, h_target))
    assert jnp.allclose(h, h_r, atol=1e-4, rtol=1e-4), "h mismatch"
    assert jnp.allclose(h_pred, hp_r, atol=1e-4, rtol=1e-4), "h_pred mismatch"
    assert jnp.allclose(h_target, ht_r, atol=1e-4, rtol=1e-4), "h_target mismatch"

    # float32 path, default (auto) tile: single tile covering all rows.
    h2, hp2, ht2 = custom_online_forward(x, prep_f32)
    jax.block_until_ready((h2, hp2, ht2))
    assert jnp.allclose(h2, h_r, atol=1e-4, rtol=1e-4), "h mismatch (auto tile)"
    assert jnp.allclose(hp2, hp_r, atol=1e-4, rtol=1e-4), "h_pred mismatch (auto tile)"
    assert jnp.allclose(ht2, ht_r, atol=1e-4, rtol=1e-4), "h_target mismatch (auto tile)"

    # bf16 weights + bf16 x + bf16 outputs (recommended on v5e/v6e/v7x): loose check.
    prep_bf16 = prepare_params(params, compute_dtype=jnp.bfloat16)
    hb, hpb, htb = custom_online_forward(x.astype(jnp.bfloat16), prep_bf16, tm=128)
    jax.block_until_ready((hb, hpb, htb))
    assert jnp.allclose(hb.astype(jnp.float32), h_r, atol=1e-1, rtol=1e-1), "bf16 h mismatch"
    assert jnp.allclose(hpb.astype(jnp.float32), hp_r, atol=1e-1, rtol=1e-1), "bf16 h_pred mismatch"
    assert jnp.allclose(htb.astype(jnp.float32), ht_r, atol=1e-1, rtol=1e-1), "bf16 h_target mismatch"

    print("KERNEL_OK")
</pallas_src>

<mosaic_0001>
module attributes {stable_mosaic.version = 11 : i64} {
  func.func @_custom_online_kernel(%arg0: i32, %arg1: memref<1x1xf32, #tpu.memory_space<smem>>, %arg2: memref<80x128xf32, #tpu.memory_space<vmem>>, %arg3: memref<128x256xf32, #tpu.memory_space<vmem>>, %arg4: memref<1x256xf32, #tpu.memory_space<vmem>>, %arg5: memref<128x128xf32, #tpu.memory_space<vmem>>, %arg6: memref<1x128xf32, #tpu.memory_space<vmem>>, %arg7: memref<128x128xf32, #tpu.memory_space<vmem>>, %arg8: memref<1x128xf32, #tpu.memory_space<vmem>>, %arg9: memref<80x128xf32, #tpu.memory_space<vmem>>, %arg10: memref<80x128xf32, #tpu.memory_space<vmem>>, %arg11: memref<80x128xf32, #tpu.memory_space<vmem>>) attributes {dimension_semantics = [#tpu.dimension_semantics<parallel>], iteration_bounds = array<i64: 4>, scalar_prefetch = 0 : i64, scratch_operands = 0 : i64, tpu.core_type = #tpu.core_type<tc>, window_params = [{transform_indices = @transform_0, window_bounds = array<i64: 1, 1>}, {transform_indices = @transform_1, window_bounds = array<i64: 80, 128>}, {pipeline_mode = #tpu.pipeline_mode<synchronous>, transform_indices = @transform_2, window_bounds = array<i64: 128, 256>}, {pipeline_mode = #tpu.pipeline_mode<synchronous>, transform_indices = @transform_3, window_bounds = array<i64: 1, 256>}, {pipeline_mode = #tpu.pipeline_mode<synchronous>, transform_indices = @transform_4, window_bounds = array<i64: 128, 128>}, {pipeline_mode = #tpu.pipeline_mode<synchronous>, transform_indices = @transform_5, window_bounds = array<i64: 1, 128>}, {pipeline_mode = #tpu.pipeline_mode<synchronous>, transform_indices = @transform_6, window_bounds = array<i64: 128, 128>}, {pipeline_mode = #tpu.pipeline_mode<synchronous>, transform_indices = @transform_7, window_bounds = array<i64: 1, 128>}, {transform_indices = @transform_8, window_bounds = array<i64: 80, 128>}, {transform_indices = @transform_9, window_bounds = array<i64: 80, 128>}, {transform_indices = @transform_10, window_bounds = array<i64: 80, 128>}]} {
    %c0 = arith.constant 0 : index
    %c0_0 = arith.constant 0 : index
    %0 = vector.load %arg2[%c0, %c0_0] : memref<80x128xf32, #tpu.memory_space<vmem>>, vector<80x128xf32>
    %c0_1 = arith.constant 0 : index
    %c0_2 = arith.constant 0 : index
    %1 = vector.load %arg3[%c0_1, %c0_2] : memref<128x256xf32, #tpu.memory_space<vmem>>, vector<128x256xf32>
    %cst = arith.constant dense<0.000000e+00> : vector<80x256xf32>
    %2 = tpu.matmul %0, %1, %cst {dimension_numbers = #tpu.dot_dimension_numbers<[1], [0], [0], [1], [0, 0, 1, 1], [], []>} : vector<80x128xf32>, vector<128x256xf32>, vector<80x256xf32> -> vector<80x256xf32>
    %c0_3 = arith.constant 0 : index
    %c0_4 = arith.constant 0 : index
    %3 = vector.load %arg4[%c0_3, %c0_4] : memref<1x256xf32, #tpu.memory_space<vmem>>, vector<1x256xf32>
    %4 = vector.broadcast %3 : vector<1x256xf32> to vector<80x256xf32>
    %5 = arith.addf %2, %4 : vector<80x256xf32>
    %6 = vector.extract_strided_slice %5 {offsets = [0, 0], sizes = [80, 128], strides = [1, 1]} : vector<80x256xf32> to vector<80x128xf32>
    %c0_5 = arith.constant 0 : index
    %c0_6 = arith.constant 0 : index
    %7 = vector.load %arg9[%c0_5, %c0_6] : memref<80x128xf32, #tpu.memory_space<vmem>>, vector<80x128xf32>
    tpu.vector_store %arg9[%c0_5, %c0_6], %6 {strides = array<i32>} : memref<80x128xf32, #tpu.memory_space<vmem>>, vector<80x128xf32>,
    %8 = vector.extract_strided_slice %5 {offsets = [0, 128], sizes = [80, 128], strides = [1, 1]} : vector<80x256xf32> to vector<80x128xf32>
    %c0_7 = arith.constant 0 : index
    %c0_8 = arith.constant 0 : index
    %9 = vector.load %arg11[%c0_7, %c0_8] : memref<80x128xf32, #tpu.memory_space<vmem>>, vector<80x128xf32>
    tpu.vector_store %arg11[%c0_7, %c0_8], %8 {strides = array<i32>} : memref<80x128xf32, #tpu.memory_space<vmem>>, vector<80x128xf32>,
    %c0_9 = arith.constant 0 : index
    %c0_10 = arith.constant 0 : index
    %10 = vector.load %arg5[%c0_9, %c0_10] : memref<128x128xf32, #tpu.memory_space<vmem>>, vector<128x128xf32>
    %cst_11 = arith.constant dense<0.000000e+00> : vector<80x128xf32>
    %11 = tpu.matmul %6, %10, %cst_11 {dimension_numbers = #tpu.dot_dimension_numbers<[1], [0], [0], [1], [0, 0, 1, 1], [], []>} : vector<80x128xf32>, vector<128x128xf32>, vector<80x128xf32> -> vector<80x128xf32>
    %c0_12 = arith.constant 0 : index
    %c0_13 = arith.constant 0 : index
    %12 = vector.load %arg6[%c0_12, %c0_13] : memref<1x128xf32, #tpu.memory_space<vmem>>, vector<1x128xf32>
    %13 = vector.broadcast %12 : vector<1x128xf32> to vector<80x128xf32>
    %14 = arith.addf %11, %13 : vector<80x128xf32>
    %c0_14 = arith.constant 0 : index
    %c0_15 = arith.constant 0 : index
    %15 = memref.load %arg1[%c0_14, %c0_15] : memref<1x1xf32, #tpu.memory_space<smem>>
    %cst_16 = arith.constant 0.000000e+00 : f32
    %16 = vector.broadcast %cst_16 : f32 to vector<80x128xf32>
    %17 = arith.cmpf oge, %14, %16 : vector<80x128xf32>
    %18 = vector.broadcast %15 : f32 to vector<80x128xf32>
    %19 = arith.mulf %18, %14 : vector<80x128xf32>
    %20 = arith.select %17, %14, %19 : vector<80x128xi1>, vector<80x128xf32>
    %c0_17 = arith.constant 0 : index
    %c0_18 = arith.constant 0 : index
    %21 = vector.load %arg7[%c0_17, %c0_18] : memref<128x128xf32, #tpu.memory_space<vmem>>, vector<128x128xf32>
    %cst_19 = arith.constant dense<0.000000e+00> : vector<80x128xf32>
    %22 = tpu.matmul %20, %21, %cst_19 {dimension_numbers = #tpu.dot_dimension_numbers<[1], [0], [0], [1], [0, 0, 1, 1], [], []>} : vector<80x128xf32>, vector<128x128xf32>, vector<80x128xf32> -> vector<80x128xf32>
    %c0_20 = arith.constant 0 : index
    %c0_21 = arith.constant 0 : index
    %23 = vector.load %arg8[%c0_20, %c0_21] : memref<1x128xf32, #tpu.memory_space<vmem>>, vector<1x128xf32>
    %24 = vector.broadcast %23 : vector<1x128xf32> to vector<80x128xf32>
    %25 = arith.addf %22, %24 : vector<80x128xf32>
    %c0_22 = arith.constant 0 : index
    %c0_23 = arith.constant 0 : index
    %26 = vector.load %arg10[%c0_22, %c0_23] : memref<80x128xf32, #tpu.memory_space<vmem>>, vector<80x128xf32>
    tpu.vector_store %arg10[%c0_22, %c0_23], %25 {strides = array<i32>} : memref<80x128xf32, #tpu.memory_space<vmem>>, vector<80x128xf32>,
    return
  }
  func.func @transform_0(%arg0: i32) -> (i32, i32) {
    %c0_i32 = arith.constant 0 : i32
    %c0_i32_0 = arith.constant 0 : i32
    %c0_i32_1 = arith.constant 0 : i32
    return %c0_i32, %c0_i32_0 : i32, i32
  }
  func.func @transform_1(%arg0: i32) -> (i32, i32) {
    %c0_i32 = arith.constant 0 : i32
    %c0_i32_0 = arith.constant 0 : i32
    return %arg0, %c0_i32 : i32, i32
  }
  func.func @transform_2(%arg0: i32) -> (i32, i32) {
    %c0_i32 = arith.constant 0 : i32
    %c0_i32_0 = arith.constant 0 : i32
    %c0_i32_1 = arith.constant 0 : i32
    return %c0_i32, %c0_i32_0 : i32, i32
  }
  func.func @transform_3(%arg0: i32) -> (i32, i32) {
    %c0_i32 = arith.constant 0 : i32
    %c0_i32_0 = arith.constant 0 : i32
    %c0_i32_1 = arith.constant 0 : i32
    return %c0_i32, %c0_i32_0 : i32, i32
  }
  func.func @transform_4(%arg0: i32) -> (i32, i32) {
    %c0_i32 = arith.constant 0 : i32
    %c0_i32_0 = arith.constant 0 : i32
    %c0_i32_1 = arith.constant 0 : i32
    return %c0_i32, %c0_i32_0 : i32, i32
  }
  func.func @transform_5(%arg0: i32) -> (i32, i32) {
    %c0_i32 = arith.constant 0 : i32
    %c0_i32_0 = arith.constant 0 : i32
    %c0_i32_1 = arith.constant 0 : i32
    return %c0_i32, %c0_i32_0 : i32, i32
  }
  func.func @transform_6(%arg0: i32) -> (i32, i32) {
    %c0_i32 = arith.constant 0 : i32
    %c0_i32_0 = arith.constant 0 : i32
    %c0_i32_1 = arith.constant 0 : i32
    return %c0_i32, %c0_i32_0 : i32, i32
  }
  func.func @transform_7(%arg0: i32) -> (i32, i32) {
    %c0_i32 = arith.constant 0 : i32
    %c0_i32_0 = arith.constant 0 : i32
    %c0_i32_1 = arith.constant 0 : i32
    return %c0_i32, %c0_i32_0 : i32, i32
  }
  func.func @transform_8(%arg0: i32) -> (i32, i32) {
    %c0_i32 = arith.constant 0 : i32
    %c0_i32_0 = arith.constant 0 : i32
    return %arg0, %c0_i32 : i32, i32
  }
  func.func @transform_9(%arg0: i32) -> (i32, i32) {
    %c0_i32 = arith.constant 0 : i32
    %c0_i32_0 = arith.constant 0 : i32
    return %arg0, %c0_i32 : i32, i32
  }
  func.func @transform_10(%arg0: i32) -> (i32, i32) {
    %c0_i32 = arith.constant 0 : i32
    %c0_i32_0 = arith.constant 0 : i32
    return %arg0, %c0_i32 : i32, i32
  }
}

</mosaic_0001>

<llo_original>
// kernel: tpu_custom_call.1
$region0: #{tpu_custom_call.1}
  #allocation0 [shape = 'u32[]', space=smem, size = 0x4, offset = 0x4, fixed_abs, tag = 'smem constant byte address 0x4 - core index']
  #allocation1 [shape = 'u32[144,128]{1,0:T(1,128)}', space=vmem, size = 0x12000, scoped, tag = 'internal scratch']
  #allocation2 [shape = 'f32[1,1]{1,0:T(1,128)S(6)}', space=smem, size = 0x200, scoped, tag = 'scoped memory for tpu_custom_call.1']
  %s0 = inlined_call_operand.<no memory space> [shape: f32[1,1], index: 0, kind: input, shape index: {}]
  %s1 = inlined_call_operand.hbm [shape: f32[300,128], index: 1, kind: input, shape index: {}]
  %s2 = inlined_call_operand.hbm [shape: f32[128,256], index: 2, kind: input, shape index: {}]
  %s3 = inlined_call_operand.vmem [shape: f32[1,256], index: 3, kind: input, shape index: {}]
  %s4 = inlined_call_operand.hbm [shape: f32[128,128], index: 4, kind: input, shape index: {}]
  %s5 = inlined_call_operand.vmem [shape: f32[1,128], index: 5, kind: input, shape index: {}]
  %s6 = inlined_call_operand.hbm [shape: f32[128,128], index: 6, kind: input, shape index: {}]
  %s7 = inlined_call_operand.vmem [shape: f32[1,128], index: 7, kind: input, shape index: {}]
  %s8 = inlined_call_operand.hbm [shape: f32[300,128], index: 8, kind: output, shape index: {0}]
  %s9 = inlined_call_operand.hbm [shape: f32[300,128], index: 9, kind: output, shape index: {1}]
  %s10 = inlined_call_operand.hbm [shape: f32[300,128], index: 10, kind: output, shape index: {2}]
  %11 = xla_tuple %s8, %s9, %s10
  %s12 = sld [smem:[#allocation0]]
  $region97: #{tpu_custom_call.1} parent=0
    _
  %s14 = ssub.s32 1, %s12
  %s15 = scalar_select 0, %s14, %s12
  %16 = sst [smem:[#allocation2]] %s0
  $region1: #{tpu_custom_call.1} parent=0
    #allocation3 [shape = 'u8[81920]{0}', space=vmem, size = 0x14000, scoped, tag = 'input window, operand 1']
    #allocation4 [shape = 's32[2]{0}', space=sflag, size = 0x8, scoped, tag = 'scoped memory for tpu_custom_call.1']
    #allocation5 [shape = 's32[2]{0}', space=sflag, size = 0x8, scoped, tag = 'scoped memory for tpu_custom_call.1']
    #allocation6 [shape = 'u8[131072]{0}', space=vmem, size = 0x20000, scoped, tag = 'input window, operand 2, single buffered']
    #allocation7 [shape = 's32[1]{0}', space=sflag, size = 0x4, scoped, tag = 'scoped memory for tpu_custom_call.1']
    #allocation8 [shape = 'u8[65536]{0}', space=vmem, size = 0x10000, scoped, tag = 'input window, operand 4, single buffered']
    #allocation9 [shape = 'u8[65536]{0}', space=vmem, size = 0x10000, scoped, tag = 'input window, operand 6, single buffered']
    #allocation10 [shape = 's32[1]{0}', space=sflag, size = 0x4, scoped, tag = 'scoped memory for tpu_custom_call.1']
    #allocation11 [shape = 'u8[81920]{0}', space=vmem, size = 0x14000, scoped, tag = 'output window, operand 0']
    #allocation12 [shape = 'u8[81920]{0}', space=vmem, size = 0x14000, scoped, tag = 'output window, operand 1']
    #allocation13 [shape = 's32[2]{0}', space=sflag, size = 0x8, scoped, tag = 'scoped memory for tpu_custom_call.1']
    #allocation14 [shape = 'u8[81920]{0}', space=vmem, size = 0x14000, scoped, tag = 'output window, operand 2']
    %17 = vsyncpa [#allocation4], 0
    %s18 = scalar_lea.sflag [#allocation4], 1
    %19 = vsyncpa %s18, 0
    %20 = vsyncpa [#allocation7], 0
    %21 = vsyncpa [#allocation10], 0
    %22 = vsyncpa [#allocation5], 0
    %s23 = scalar_lea.sflag [#allocation5], 1
    %24 = vsyncpa %s23, 0
    %25 = vsyncpa [#allocation13], 0
    %s26 = scalar_lea.sflag [#allocation13], 1
    %27 = vsyncpa %s26, 0
    loop: start=0, step=1, limit=6
    $region2: #{tpu_custom_call.1} parent=1 // loop_pre_header
      _
    $region3: #{tpu_custom_call.1} parent=1 // loop_header
      %s29 = sphi 0, %s33
      %p30 = scmp.ge.s32.totalorder %s29, 6
      %s37 = sphi 0, %s37
      %s39 = sphi 0, %s37
      %s40 = sphi 0, %s39
      %s54 = sphi 0, %s40
      %s60 = sphi 0, %s62
      %s63 = sphi 0, %s60
      %s64 = sphi 0, %s63
      %s80 = sphi 0, %s64
      %s84 = sphi 0, %s84
      %s86 = sphi 0, %s84
      %s87 = sphi 0, %s86
      %s101 = sphi 0, %s87
      %s105 = sphi 0, %s105
      %s107 = sphi 0, %s105
      %s108 = sphi 0, %s107
      %s122 = sphi 0, %s108
      %s126 = sphi 0, %s126
      %s128 = sphi 0, %s126
      %s129 = sphi 0, %s128
      %s143 = sphi 0, %s129
      %s147 = sphi 0, %s147
      %s149 = sphi 0, %s147
      %s150 = sphi 0, %s149
      %s164 = sphi 0, %s150
      %s168 = sphi 0, %s168
      %s170 = sphi 0, %s168
      %s171 = sphi 0, %s170
      %s185 = sphi 0, %s171
      %s189 = sphi 0, %s189
      %s191 = sphi 0, %s189
      %s192 = sphi 0, %s191
      %s206 = sphi 0, %s192
      %s212 = sphi 0, %s214
      %s215 = sphi 0, %s212
      %s216 = sphi 0, %s215
      %s232 = sphi 0, %s216
      %s238 = sphi 0, %s240
      %s241 = sphi 0, %s238
      %s242 = sphi 0, %s241
      %s258 = sphi 0, %s242
      %s264 = sphi 0, %s266
      %s267 = sphi 0, %s264
      %s268 = sphi 0, %s267
      %s284 = sphi 0, %s268
    $region4: #{tpu_custom_call.1} parent=1 // loop_header_branch
      %32 = sbr.rel (%p30) target = $region8
    $region5: #{tpu_custom_call.1} parent=1 // loop_body
      %s34 = ssub.s32 %s29, 1
      %s35 = ssub.s32 %s29, 2
      %s36 = sadd.s32 %s29, 1
      %s38 = sadd.s32 %s37, 1
      %p41 = scmp.eq.s32.totalorder %s29, 3
      %p42 = scmp.ne.s32.totalorder %s37, %s39
      %p43 = scmp.eq.s32.totalorder %s29, 0
      %p44 = por %p42, %p43
      %p45 = scmp.ne.s32.totalorder %s37, %s39
      %p46 = scmp.eq.s32.totalorder %s34, 3
      %p47 = por %p45, %p46
      %p48 = scmp.ne.s32.totalorder %s39, %s40
      %p49 = scmp.eq.s32.totalorder %s34, 0
      %p50 = por %p48, %p49
      %p51 = scmp.ne.s32.totalorder %s39, %s40
      %p52 = scmp.eq.s32.totalorder %s35, 3
      %p53 = por %p51, %p52
      %p55 = scmp.ne.s32.totalorder %s40, %s54
      %p56 = scmp.eq.s32.totalorder %s35, 0
      %p57 = por %p55, %p56
      %s58 = ssub.s32 %s29, %s36
      %p59 = scmp.eq.s32.totalorder %s58, 0
      %s61 = sadd.s32 %s60, 1
      %s62 = scalar_select %p59, %s60, %s61
      %p65 = pneg %p59
      %p66 = scmp.eq.s32.totalorder %s29, 3
      %p67 = por %p65, %p66
      %p68 = scmp.ne.s32.totalorder %s60, %s63
      %p69 = scmp.eq.s32.totalorder %s29, 0
      %p70 = por %p68, %p69
      %p71 = scmp.ne.s32.totalorder %s60, %s63
      %p72 = scmp.eq.s32.totalorder %s34, 3
      %p73 = por %p71, %p72
      %p74 = scmp.ne.s32.totalorder %s63, %s64
      %p75 = scmp.eq.s32.totalorder %s34, 0
      %p76 = por %p74, %p75
      %p77 = scmp.ne.s32.totalorder %s63, %s64
      %p78 = scmp.eq.s32.totalorder %s35, 3
      %p79 = por %p77, %p78
      %p81 = scmp.ne.s32.totalorder %s64, %s80
      %p82 = scmp.eq.s32.totalorder %s35, 0
      %p83 = por %p81, %p82
      %s85 = sadd.s32 %s84, 1
      %p88 = scmp.eq.s32.totalorder %s29, 3
      %p89 = scmp.ne.s32.totalorder %s84, %s86
      %p90 = scmp.eq.s32.totalorder %s29, 0
      %p91 = por %p89, %p90
      %p92 = scmp.ne.s32.totalorder %s84, %s86
      %p93 = scmp.eq.s32.totalorder %s34, 3
      %p94 = por %p92, %p93
      %p95 = scmp.ne.s32.totalorder %s86, %s87
      %p96 = scmp.eq.s32.totalorder %s34, 0
      %p97 = por %p95, %p96
      %p98 = scmp.ne.s32.totalorder %s86, %s87
      %p99 = scmp.eq.s32.totalorder %s35, 3
      %p100 = por %p98, %p99
      %p102 = scmp.ne.s32.totalorder %s87, %s101
      %p103 = scmp.eq.s32.totalorder %s35, 0
      %p104 = por %p102, %p103
      %s106 = sadd.s32 %s105, 1
      %p109 = scmp.eq.s32.totalorder %s29, 3
      %p110 = scmp.ne.s32.totalorder %s105, %s107
      %p111 = scmp.eq.s32.totalorder %s29, 0
      %p112 = por %p110, %p111
      %p113 = scmp.ne.s32.totalorder %s105, %s107
      %p114 = scmp.eq.s32.totalorder %s34, 3
      %p115 = por %p113, %p114
      %p116 = scmp.ne.s32.totalorder %s107, %s108
      %p117 = scmp.eq.s32.totalorder %s34, 0
      %p118 = por %p116, %p117
      %p119 = scmp.ne.s32.totalorder %s107, %s108
      %p120 = scmp.eq.s32.totalorder %s35, 3
      %p121 = por %p119, %p120
      %p123 = scmp.ne.s32.totalorder %s108, %s122
      %p124 = scmp.eq.s32.totalorder %s35, 0
      %p125 = por %p123, %p124
      %s127 = sadd.s32 %s126, 1
      %p130 = scmp.eq.s32.totalorder %s29, 3
      %p131 = scmp.ne.s32.totalorder %s126, %s128
      %p132 = scmp.eq.s32.totalorder %s29, 0
      %p133 = por %p131, %p132
      %p134 = scmp.ne.s32.totalorder %s126, %s128
      %p135 = scmp.eq.s32.totalorder %s34, 3
      %p136 = por %p134, %p135
      %p137 = scmp.ne.s32.totalorder %s128, %s129
      %p138 = scmp.eq.s32.totalorder %s34, 0
      %p139 = por %p137, %p138
      %p140 = scmp.ne.s32.totalorder %s128, %s129
      %p141 = scmp.eq.s32.totalorder %s35, 3
      %p142 = por %p140, %p141
      %p144 = scmp.ne.s32.totalorder %s129, %s143
      %p145 = scmp.eq.s32.totalorder %s35, 0
      %p146 = por %p144, %p145
      %s148 = sadd.s32 %s147, 1
      %p151 = scmp.eq.s32.totalorder %s29, 3
      %p152 = scmp.ne.s32.totalorder %s147, %s149
      %p153 = scmp.eq.s32.totalorder %s29, 0
      %p154 = por %p152, %p153
      %p155 = scmp.ne.s32.totalorder %s147, %s149
      %p156 = scmp.eq.s32.totalorder %s34, 3
      %p157 = por %p155, %p156
      %p158 = scmp.ne.s32.totalorder %s149, %s150
      %p159 = scmp.eq.s32.totalorder %s34, 0
      %p160 = por %p158, %p159
      %p161 = scmp.ne.s32.totalorder %s149, %s150
      %p162 = scmp.eq.s32.totalorder %s35, 3
      %p163 = por %p161, %p162
      %p165 = scmp.ne.s32.totalorder %s150, %s164
      %p166 = scmp.eq.s32.totalorder %s35, 0
      %p167 = por %p165, %p166
      %s169 = sadd.s32 %s168, 1
      %p172 = scmp.eq.s32.totalorder %s29, 3
      %p173 = scmp.ne.s32.totalorder %s168, %s170
      %p174 = scmp.eq.s32.totalorder %s29, 0
      %p175 = por %p173, %p174
      %p176 = scmp.ne.s32.totalorder %s168, %s170
      %p177 = scmp.eq.s32.totalorder %s34, 3
      %p178 = por %p176, %p177
      %p179 = scmp.ne.s32.totalorder %s170, %s171
      %p180 = scmp.eq.s32.totalorder %s34, 0
      %p181 = por %p179, %p180
      %p182 = scmp.ne.s32.totalorder %s170, %s171
      %p183 = scmp.eq.s32.totalorder %s35, 3
      %p184 = por %p182, %p183
      %p186 = scmp.ne.s32.totalorder %s171, %s185
      %p187 = scmp.eq.s32.totalorder %s35, 0
      %p188 = por %p186, %p187
      %s190 = sadd.s32 %s189, 1
      %p193 = scmp.eq.s32.totalorder %s29, 3
      %p194 = scmp.ne.s32.totalorder %s189, %s191
      %p195 = scmp.eq.s32.totalorder %s29, 0
      %p196 = por %p194, %p195
      %p197 = scmp.ne.s32.totalorder %s189, %s191
      %p198 = scmp.eq.s32.totalorder %s34, 3
      %p199 = por %p197, %p198
      %p200 = scmp.ne.s32.totalorder %s191, %s192
      %p201 = scmp.eq.s32.totalorder %s34, 0
      %p202 = por %p200, %p201
      %p203 = scmp.ne.s32.totalorder %s191, %s192
      %p204 = scmp.eq.s32.totalorder %s35, 3
      %p205 = por %p203, %p204
      %p207 = scmp.ne.s32.totalorder %s192, %s206
      %p208 = scmp.eq.s32.totalorder %s35, 0
      %p209 = por %p207, %p208
      %s210 = ssub.s32 %s29, %s36
      %p211 = scmp.eq.s32.totalorder %s210, 0
      %s213 = sadd.s32 %s212, 1
      %s214 = scalar_select %p211, %s212, %s213
      %p217 = pneg %p211
      %p218 = scmp.eq.s32.totalorder %s29, 3
      %p219 = por %p217, %p218
      %p220 = scmp.ne.s32.totalorder %s212, %s215
      %p221 = scmp.eq.s32.totalorder %s29, 0
      %p222 = por %p220, %p221
      %p223 = scmp.ne.s32.totalorder %s212, %s215
      %p224 = scmp.eq.s32.totalorder %s34, 3
      %p225 = por %p223, %p224
      %p226 = scmp.ne.s32.totalorder %s215, %s216
      %p227 = scmp.eq.s32.totalorder %s34, 0
      %p228 = por %p226, %p227
      %p229 = scmp.ne.s32.totalorder %s215, %s216
      %p230 = scmp.eq.s32.totalorder %s35, 3
      %p231 = por %p229, %p230
      %p233 = scmp.ne.s32.totalorder %s216, %s232
      %p234 = scmp.eq.s32.totalorder %s35, 0
      %p235 = por %p233, %p234
      %s236 = ssub.s32 %s29, %s36
      %p237 = scmp.eq.s32.totalorder %s236, 0
      %s239 = sadd.s32 %s238, 1
      %s240 = scalar_select %p237, %s238, %s239
      %p243 = pneg %p237
      %p244 = scmp.eq.s32.totalorder %s29, 3
      %p245 = por %p243, %p244
      %p246 = scmp.ne.s32.totalorder %s238, %s241
      %p247 = scmp.eq.s32.totalorder %s29, 0
      %p248 = por %p246, %p247
      %p249 = scmp.ne.s32.totalorder %s238, %s241
      %p250 = scmp.eq.s32.totalorder %s34, 3
      %p251 = por %p249, %p250
      %p252 = scmp.ne.s32.totalorder %s241, %s242
      %p253 = scmp.eq.s32.totalorder %s34, 0
      %p254 = por %p252, %p253
      %p255 = scmp.ne.s32.totalorder %s241, %s242
      %p256 = scmp.eq.s32.totalorder %s35, 3
      %p257 = por %p255, %p256
      %p259 = scmp.ne.s32.totalorder %s242, %s258
      %p260 = scmp.eq.s32.totalorder %s35, 0
      %p261 = por %p259, %p260
      %s262 = ssub.s32 %s29, %s36
      %p263 = scmp.eq.s32.totalorder %s262, 0
      %s265 = sadd.s32 %s264, 1
      %s266 = scalar_select %p263, %s264, %s265
      %p269 = pneg %p263
      %p270 = scmp.eq.s32.totalorder %s29, 3
      %p271 = por %p269, %p270
      %p272 = scmp.ne.s32.totalorder %s264, %s267
      %p273 = scmp.eq.s32.totalorder %s29, 0
      %p274 = por %p272, %p273
      %p275 = scmp.ne.s32.totalorder %s264, %s267
      %p276 = scmp.eq.s32.totalorder %s34, 3
      %p277 = por %p275, %p276
      %p278 = scmp.ne.s32.totalorder %s267, %s268
      %p279 = scmp.eq.s32.totalorder %s34, 0
      %p280 = por %p278, %p279
      %p281 = scmp.ne.s32.totalorder %s267, %s268
      %p282 = scmp.eq.s32.totalorder %s35, 3
      %p283 = por %p281, %p282
      %p285 = scmp.ne.s32.totalorder %s268, %s284
      %p286 = scmp.eq.s32.totalorder %s35, 0
      %p287 = por %p285, %p286
      %p288 = scmp.le.s32.totalorder 1, %s29
      %p289 = scmp.lt.s32.totalorder %s29, 5
      %p290 = pnand %p288, %p289
      %p291 = pneg %p290
      // Predicated region
      $region9: #{tpu_custom_call.1} parent=5 // pred_check
        _
      $region10: #{tpu_custom_call.1} parent=5 // pred_check_branch
        %293 = sbr.rel (%p290) target = $region12
      $region11: #{tpu_custom_call.1} parent=5 // pred_region
        %s294 = ssub.s32 %s29, 1
        // Predicated region
        $region13: #{tpu_custom_call.1} parent=11 // pred_check
          %p295 = pneg %p50
        $region14: #{tpu_custom_call.1} parent=11 // pred_check_branch
          %297 = sbr.rel (%p295) target = $region16
        $region15: #{tpu_custom_call.1} parent=11 // pred_region
          _
        $region16: #{tpu_custom_call.1} parent=11 // pred_fallthru
          _
        // Predicated region
        $region17: #{tpu_custom_call.1} parent=11 // pred_check
          %p298 = pneg %p97
        $region18: #{tpu_custom_call.1} parent=11 // pred_check_branch
          %300 = sbr.rel (%p298) target = $region20
        $region19: #{tpu_custom_call.1} parent=11 // pred_region
          %s302 = ssub.s32 4096, 4096
          %303 = vsyncadd [#allocation7], %s302
          %s304 = sshll.u32 [#allocation6], 4
          %s305 = int_to_ptr.vmem [resolvable:$true] %s304
          %310 = dma.hbm_to_vmem [thread:$0]  %s2, 4096, %s305, [#allocation7], 256, 256, 16
        $region20: #{tpu_custom_call.1} parent=11 // pred_fallthru
          _
        // Predicated region
        $region21: #{tpu_custom_call.1} parent=11 // pred_check
          %p311 = pneg %p118
        $region22: #{tpu_custom_call.1} parent=11 // pred_check_branch
          %313 = sbr.rel (%p311) target = $region24
        $region23: #{tpu_custom_call.1} parent=11 // pred_region
          _
        $region24: #{tpu_custom_call.1} parent=11 // pred_fallthru
          _
        // Predicated region
        $region25: #{tpu_custom_call.1} parent=11 // pred_check
          %p314 = pneg %p139
        $region26: #{tpu_custom_call.1} parent=11 // pred_check_branch
          %316 = sbr.rel (%p314) target = $region28
        $region27: #{tpu_custom_call.1} parent=11 // pred_region
          %s318 = ssub.s32 2048, 2048
          %319 = vsyncadd [#allocation7], %s318
          %s320 = sshll.u32 [#allocation8], 4
          %s321 = int_to_ptr.vmem [resolvable:$true] %s320
          %326 = dma.hbm_to_vmem [thread:$0]  %s4, 2048, %s321, [#allocation7], 128, 128, 8
        $region28: #{tpu_custom_call.1} parent=11 // pred_fallthru
          _
        // Predicated region
        $region29: #{tpu_custom_call.1} parent=11 // pred_check
          %p327 = pneg %p160
        $region30: #{tpu_custom_call.1} parent=11 // pred_check_branch
          %329 = sbr.rel (%p327) target = $region32
        $region31: #{tpu_custom_call.1} parent=11 // pred_region
          _
        $region32: #{tpu_custom_call.1} parent=11 // pred_fallthru
          _
        // Predicated region
        $region33: #{tpu_custom_call.1} parent=11 // pred_check
          %p330 = pneg %p181
        $region34: #{tpu_custom_call.1} parent=11 // pred_check_branch
          %332 = sbr.rel (%p330) target = $region36
        $region35: #{tpu_custom_call.1} parent=11 // pred_region
          %s334 = ssub.s32 2048, 2048
          %335 = vsyncadd [#allocation10], %s334
          %s336 = sshll.u32 [#allocation9], 4
          %s337 = int_to_ptr.vmem [resolvable:$true] %s336
          %342 = dma.hbm_to_vmem [thread:$0]  %s6, 2048, %s337, [#allocation10], 128, 128, 8
        $region36: #{tpu_custom_call.1} parent=11 // pred_fallthru
          _
        // Predicated region
        $region37: #{tpu_custom_call.1} parent=11 // pred_check
          %p343 = pneg %p202
        $region38: #{tpu_custom_call.1} parent=11 // pred_check_branch
          %345 = sbr.rel (%p343) target = $region40
        $region39: #{tpu_custom_call.1} parent=11 // pred_region
          _
        $region40: #{tpu_custom_call.1} parent=11 // pred_fallthru
          _
      $region12: #{tpu_custom_call.1} parent=5 // pred_fallthru
        _
      %p346 = scmp.lt.s32.totalorder %s29, 4
      // Predicated region
      $region41: #{tpu_custom_call.1} parent=5 // pred_check
        %p347 = pneg %p346
      $region42: #{tpu_custom_call.1} parent=5 // pred_check_branch
        %349 = sbr.rel (%p347) target = $region44
      $region43: #{tpu_custom_call.1} parent=5 // pred_region
        // Predicated region
        $region45: #{tpu_custom_call.1} parent=43 // pred_check
          %p350 = pneg %p70
        $region46: #{tpu_custom_call.1} parent=43 // pred_check_branch
          %352 = sbr.rel (%p350) target = $region48
        $region47: #{tpu_custom_call.1} parent=43 // pred_region
          %s353 = sand.u32 %s60, 1
          %s354 = scalar_lea.sflag [#allocation4], %s353
          %s355 = sand.u32 %s60, 1
          %s356 = smul.addr %s355, 80
          %s357 = scalar_lea.vmem [#allocation3], %s356
          %s358 = smul.u32 10, %s29
          %s359 = ssub.s32 38, %s358
          %p360 = scmp.lt.s32.totalorder %s359, 10
          %s361 = scalar_select %p360, %s359, 10
          %s362 = smul.u32 128, %s361
          %s364 = ssub.s32 1280, %s362
          %365 = vsyncadd %s354, %s364
          %p366 = scmp.ne.s32.totalorder 0, %s362
          %s367 = smul.addr %s358, 128
          %s368 = scalar_lea.hbm %s1, %s367
          %s369 = smul.u32 8, %s361
          %s370 = sshll.u32 %s357, 4
          %s371 = int_to_ptr.vmem [resolvable:$true] %s370
          %s372 = sshll.u32 %s369, 4
          %376 = dma.hbm_to_vmem [thread:$0]  (%p366), %s368, %s372, %s371, %s354, 128, 128, 8
        $region48: #{tpu_custom_call.1} parent=43 // pred_fallthru
          _
      $region44: #{tpu_custom_call.1} parent=5 // pred_fallthru
        _
      %p377 = scmp.le.s32.totalorder 1, %s29
      %p378 = scmp.lt.s32.totalorder %s29, 5
      %p379 = pnand %p377, %p378
      %p380 = pneg %p379
      // Predicated region
      $region49: #{tpu_custom_call.1} parent=5 // pred_check
        _
      $region50: #{tpu_custom_call.1} parent=5 // pred_check_branch
        %382 = sbr.rel (%p379) target = $region52
      $region51: #{tpu_custom_call.1} parent=5 // pred_region
        %s383 = ssub.s32 %s29, 1
        %s384 = sand.u32 %s63, 1
        %s385 = scalar_lea.sflag [#allocation4], %s384
        %s386 = sand.u32 %s63, 1
        %s387 = smul.addr %s386, 80
        %s388 = scalar_lea.vmem [#allocation3], %s387
        // Predicated region
        $region53: #{tpu_custom_call.1} parent=51 // pred_check
          %p389 = pneg %p76
        $region54: #{tpu_custom_call.1} parent=51 // pred_check_branch
          %391 = sbr.rel (%p389) target = $region56
        $region55: #{tpu_custom_call.1} parent=51 // pred_region
          %392 = dma.done %s385, 1280
        $region56: #{tpu_custom_call.1} parent=51 // pred_fallthru
          _
        // Predicated region
        $region57: #{tpu_custom_call.1} parent=51 // pred_check
          %p393 = pneg %p97
        $region58: #{tpu_custom_call.1} parent=51 // pred_check_branch
          %395 = sbr.rel (%p393) target = $region60
        $region59: #{tpu_custom_call.1} parent=51 // pred_region
          %396 = dma.done [#allocation7], 4096
        $region60: #{tpu_custom_call.1} parent=51 // pred_fallthru
          _
        // Predicated region
        $region61: #{tpu_custom_call.1} parent=51 // pred_check
          %p397 = pneg %p139
        $region62: #{tpu_custom_call.1} parent=51 // pred_check_branch
          %399 = sbr.rel (%p397) target = $region64
        $region63: #{tpu_custom_call.1} parent=51 // pred_region
          %400 = dma.done [#allocation7], 2048
        $region64: #{tpu_custom_call.1} parent=51 // pred_fallthru
          _
        // Predicated region
        $region65: #{tpu_custom_call.1} parent=51 // pred_check
          %p401 = pneg %p181
        $region66: #{tpu_custom_call.1} parent=51 // pred_check_branch
          %403 = sbr.rel (%p401) target = $region68
        $region67: #{tpu_custom_call.1} parent=51 // pred_region
          %404 = dma.done [#allocation10], 2048
        $region68: #{tpu_custom_call.1} parent=51 // pred_fallthru
          _
        %p405 = pneg %p50
        %p406 = pneg %p47
        %s407 = sand.u32 %s63, 1
        %s408 = scalar_lea.sflag [#allocation4], %s407
        %s409 = sand.u32 %s63, 1
        %s410 = smul.addr %s409, 80
        %s411 = scalar_lea.vmem [#allocation3], %s410
        %p412 = pneg %p76
        %p413 = pneg %p73
        %p414 = pneg %p97
        %p415 = pneg %p94
        %p416 = pneg %p118
        %p417 = pneg %p115
        %p418 = pneg %p139
        %p419 = pneg %p136
        %p420 = pneg %p160
        %p421 = pneg %p157
        %p422 = pneg %p181
        %p423 = pneg %p178
        %p424 = pneg %p202
        %p425 = pneg %p199
        %p426 = pneg %p228
        %p427 = pneg %p225
        %s428 = sand.u32 %s215, 1
        %s429 = scalar_lea.sflag [#allocation5], %s428
        %s430 = sand.u32 %s215, 1
        %s431 = smul.addr %s430, 80
        %s432 = scalar_lea.vmem [#allocation11], %s431
        %p433 = pneg %p254
        %p434 = pneg %p251
        %s435 = sand.u32 %s34, 1
        %s436 = scalar_lea.sflag [#allocation13], %s435
        %s437 = sand.u32 %s241, 1
        %s438 = smul.addr %s437, 80
        %s439 = scalar_lea.vmem [#allocation12], %s438
        %p440 = pneg %p280
        %p441 = pneg %p277
        %s442 = sand.u32 %s34, 1
        %s443 = scalar_lea.sflag [#allocation13], %s442
        %s444 = sand.u32 %s267, 1
        %s445 = smul.addr %s444, 80
        %s446 = scalar_lea.vmem [#allocation14], %s445
        %s447 = smul.u32 10, %s34
        %s448 = ssub.s32 38, %s447
        %p449 = scmp.lt.s32.totalorder %s448, 10
        %s450 = scalar_select %p449, %s448, 10
        %s451 = smul.u32 128, %s450
        %s452 = smul.u32 10, %s34
        %s453 = ssub.s32 38, %s452
        %p454 = scmp.lt.s32.totalorder %s453, 10
        %s455 = scalar_select %p454, %s453, 10
        %s456 = smul.u32 128, %s455
        %s457 = smul.u32 10, %s34
        %s458 = ssub.s32 38, %s457
        %p459 = scmp.lt.s32.totalorder %s458, 10
        %s460 = scalar_select %p459, %s458, 10
        %s461 = smul.u32 128, %s460
        %s462 = smul.u32 10, %s34
        %s463 = ssub.s32 38, %s462
        %p464 = scmp.lt.s32.totalorder %s463, 10
        %s465 = scalar_select %p464, %s463, 10
        %s466 = smul.u32 128, %s465
        %v467 = vld [vmem:[%s388] sm:$0xff]
        %v468 = vld [vmem:[%s388 + $0x8] sm:$0xff]
        %v469 = vld [vmem:[%s388 + $0x10] sm:$0xff]
        %v470 = vld [vmem:[%s388 + $0x18] sm:$0xff]
        %v471 = vld [vmem:[%s388 + $0x20] sm:$0xff]
        %v472 = vld [vmem:[%s388 + $0x28] sm:$0xff]
        %v473 = vld [vmem:[%s388 + $0x30] sm:$0xff]
        %v474 = vld [vmem:[%s388 + $0x38] sm:$0xff]
        %v475 = vld [vmem:[%s388 + $0x40] sm:$0xff]
        %v476 = vld [vmem:[%s388 + $0x48] sm:$0xff]
        %v477 = vld [vmem:[#allocation6] sm:$0xff]
        %v478 = vld [vmem:[#allocation6 + $0x8] sm:$0xff]
        %v479 = vld [vmem:[#allocation6 + $0x10] sm:$0xff]
        %v480 = vld [vmem:[#allocation6 + $0x18] sm:$0xff]
        %v481 = vld [vmem:[#allocation6 + $0x20] sm:$0xff]
        %v482 = vld [vmem:[#allocation6 + $0x28] sm:$0xff]
        %v483 = vld [vmem:[#allocation6 + $0x30] sm:$0xff]
        %v484 = vld [vmem:[#allocation6 + $0x38] sm:$0xff]
        %v485 = vld [vmem:[#allocation6 + $0x40] sm:$0xff]
        %v486 = vld [vmem:[#allocation6 + $0x48] sm:$0xff]
        %v487 = vld [vmem:[#allocation6 + $0x50] sm:$0xff]
        %v488 = vld [vmem:[#allocation6 + $0x58] sm:$0xff]
        %v489 = vld [vmem:[#allocation6 + $0x60] sm:$0xff]
        %v490 = vld [vmem:[#allocation6 + $0x68] sm:$0xff]
        %v491 = vld [vmem:[#allocation6 + $0x70] sm:$0xff]
        %v492 = vld [vmem:[#allocation6 + $0x78] sm:$0xff]
        %v493 = vld [vmem:[#allocation6 + $0x80] sm:$0xff]
        %v494 = vld [vmem:[#allocation6 + $0x88] sm:$0xff]
        %v495 = vld [vmem:[#allocation6 + $0x90] sm:$0xff]
        %v496 = vld [vmem:[#allocation6 + $0x98] sm:$0xff]
        %v497 = vld [vmem:[#allocation6 + $0xa0] sm:$0xff]
        %v498 = vld [vmem:[#allocation6 + $0xa8] sm:$0xff]
        %v499 = vld [vmem:[#allocation6 + $0xb0] sm:$0xff]
        %v500 = vld [vmem:[#allocation6 + $0xb8] sm:$0xff]
        %v501 = vld [vmem:[#allocation6 + $0xc0] sm:$0xff]
        %v502 = vld [vmem:[#allocation6 + $0xc8] sm:$0xff]
        %v503 = vld [vmem:[#allocation6 + $0xd0] sm:$0xff]
        %v504 = vld [vmem:[#allocation6 + $0xd8] sm:$0xff]
        %v505 = vld [vmem:[#allocation6 + $0xe0] sm:$0xff]
        %v506 = vld [vmem:[#allocation6 + $0xe8] sm:$0xff]
        %v507 = vld [vmem:[#allocation6 + $0xf0] sm:$0xff]
        %v508 = vld [vmem:[#allocation6 + $0xf8] sm:$0xff]
        %v509 = vld [vmem:[%s3] sm:$0x3]
        %v511 = vlaneseq
        %v512 = vshrl.u32 %v511, 7
        %v513 = vsub.s32 0, %v512
        %v514 = vrot.slane %v509, %v513
        %v515 = vlaneseq
        %v516 = vshrl.u32 %v515, 7
        %v517 = vsub.s32 1, %v516
        %v518 = vrot.slane %v509, %v517
        %521 = vmatprep.subr.mxu0 %v478
        %522 = vmatpush1.msra.mxu0 %v477
        %523 = vmatprep.subr.mxu0 %v480
        %524 = vmatpush1.msra.mxu0 %v479
        %525 = vmatprep.subr.mxu0 %v482
        %526 = vmatpush1.msra.mxu0 %v481
        %527 = vmatprep.subr.mxu0 %v484
        %528 = vmatpush1.msra.mxu0 %v483
        %529 = vmatprep.subr.mxu0 %v486
        %530 = vmatpush1.msra.mxu0 %v485
        %531 = vmatprep.subr.mxu0 %v488
        %532 = vmatpush1.msra.mxu0 %v487
        %533 = vmatprep.subr.mxu0 %v490
        %534 = vmatpush1.msra.mxu0 %v489
        %535 = vmatprep.subr.mxu0 %v492
        %536 = vmatpush1.msra.mxu0 %v491
        %537 = vmatprep.subr.mxu0 %v494
        %538 = vmatpush1.msra.mxu0 %v493
        %539 = vmatprep.subr.mxu0 %v496
        %540 = vmatpush1.msra.mxu0 %v495
        %541 = vmatprep.subr.mxu0 %v498
        %542 = vmatpush1.msra.mxu0 %v497
        %543 = vmatprep.subr.mxu0 %v500
        %544 = vmatpush1.msra.mxu0 %v499
        %545 = vmatprep.subr.mxu0 %v502
        %546 = vmatpush1.msra.mxu0 %v501
        %547 = vmatprep.subr.mxu0 %v504
        %548 = vmatpush1.msra.mxu0 %v503
        %549 = vmatprep.subr.mxu0 %v506
        %550 = vmatpush1.msra.mxu0 %v505
        %551 = vmatprep.subr.mxu0 %v508
        %552 = vmatpush1.msra.mxu0 %v507
        %553 = vmatprep.subr.mxu0 0.0
        %554 = vmatpush1.msra.mxu0 0.0
        %555 = vmatprep.subr.mxu0 0.0
        %556 = vmatpush1.msra.mxu0 0.0
        %557 = vmatprep.subr.mxu0 0.0
        %558 = vmatpush1.msra.mxu0 0.0
        %559 = vmatprep.subr.mxu0 0.0
        %560 = vmatpush1.msra.mxu0 0.0
        %561 = vmatprep.subr.mxu0 0.0
        %562 = vmatpush1.msra.mxu0 0.0
        %563 = vmatprep.subr.mxu0 0.0
        %564 = vmatpush1.msra.mxu0 0.0
        %565 = vmatprep.subr.mxu0 0.0
        %566 = vmatpush1.msra.mxu0 0.0
        %567 = vmatprep.subr.mxu0 0.0
        %568 = vmatpush1.msra.mxu0 0.0
        %569 = vmatprep.subr.mxu0 0.0
        %570 = vmatpush1.msra.mxu0 0.0
        %571 = vmatprep.subr.mxu0 0.0
        %572 = vmatpush1.msra.mxu0 0.0
        %573 = vmatprep.subr.mxu0 0.0
        %574 = vmatpush1.msra.mxu0 0.0
        %575 = vmatprep.subr.mxu0 0.0
        %576 = vmatpush1.msra.mxu0 0.0
        %577 = vmatprep.subr.mxu0 0.0
        %578 = vmatpush1.msra.mxu0 0.0
        %579 = vmatprep.subr.mxu0 0.0
        %580 = vmatpush1.msra.mxu0 0.0
        %581 = vmatprep.subr.mxu0 0.0
        %582 = vmatpush1.msra.mxu0 0.0
        %583 = vmatprep.subr.mxu0 0.0
        %584 = vmatpush1.msra.mxu0 0.0
        %585 = vmatprep.mubr.f32.mxu0 0.0
        %586 = vmatmul.mubr.f32.gmra.mrb[0].mxu0 %v467
        %v587 = vpop.f32.mrb[0].mxu0
        %v588 = vadd.f32 %v514, %v587
        %v589 = vpop.f32.mrb[0].mxu0
        %v590 = vadd.f32 %v518, %v589
        %591 = vmatprep.mubr.f32.mxu0 0.0
        %592 = vmatmul.mubr.f32.gmra.mrb[0].mxu0 %v468
        %v593 = vpop.f32.mrb[0].mxu0
        %v594 = vadd.f32 %v514, %v593
        %v595 = vpop.f32.mrb[0].mxu0
        %v596 = vadd.f32 %v518, %v595
        %597 = vmatprep.mubr.f32.mxu0 0.0
        %598 = vmatmul.mubr.f32.gmra.mrb[0].mxu0 %v469
        %v599 = vpop.f32.mrb[0].mxu0
        %v600 = vadd.f32 %v514, %v599
        %v601 = vpop.f32.mrb[0].mxu0
        %v602 = vadd.f32 %v518, %v601
        %603 = vmatprep.mubr.f32.mxu0 0.0
        %604 = vmatmul.mubr.f32.gmra.mrb[0].mxu0 %v470
        %v605 = vpop.f32.mrb[0].mxu0
        %v606 = vadd.f32 %v514, %v605
        %v607 = vpop.f32.mrb[0].mxu0
        %v608 = vadd.f32 %v518, %v607
        %609 = vmatprep.mubr.f32.mxu0 0.0
        %610 = vmatmul.mubr.f32.gmra.mrb[0].mxu0 %v471
        %v611 = vpop.f32.mrb[0].mxu0
        %v612 = vadd.f32 %v514, %v611
        %v613 = vpop.f32.mrb[0].mxu0
        %v614 = vadd.f32 %v518, %v613
        %615 = vmatprep.mubr.f32.mxu0 0.0
        %616 = vmatmul.mubr.f32.gmra.mrb[0].mxu0 %v472
        %v617 = vpop.f32.mrb[0].mxu0
        %v618 = vadd.f32 %v514, %v617
        %v619 = vpop.f32.mrb[0].mxu0
        %v620 = vadd.f32 %v518, %v619
        %621 = vmatprep.mubr.f32.mxu0 0.0
        %622 = vmatmul.mubr.f32.gmra.mrb[0].mxu0 %v473
        %v623 = vpop.f32.mrb[0].mxu0
        %v624 = vadd.f32 %v514, %v623
        %v625 = vpop.f32.mrb[0].mxu0
        %v626 = vadd.f32 %v518, %v625
        %627 = vmatprep.mubr.f32.mxu0 0.0
        %628 = vmatmul.mubr.f32.gmra.mrb[0].mxu0 %v474
        %v629 = vpop.f32.mrb[0].mxu0
        %v630 = vadd.f32 %v514, %v629
        %v631 = vpop.f32.mrb[0].mxu0
        %v632 = vadd.f32 %v518, %v631
        %633 = vmatprep.mubr.f32.mxu0 0.0
        %634 = vmatmul.mubr.f32.gmra.mrb[0].mxu0 %v475
        %v635 = vpop.f32.mrb[0].mxu0
        %v636 = vadd.f32 %v514, %v635
        %v637 = vpop.f32.mrb[0].mxu0
        %v638 = vadd.f32 %v518, %v637
        %639 = vmatprep.mubr.f32.mxu0 0.0
        %640 = vmatmul.mubr.f32.gmra.mrb[0].mxu0 %v476
        %v641 = vpop.f32.mrb[0].mxu0
        %v642 = vadd.f32 %v514, %v641
        %v643 = vpop.f32.mrb[0].mxu0
        %v644 = vadd.f32 %v518, %v643
        %645 = vdwg.mxu0
        %646 = vst [vmem:[%s432] sm:$0xff] %v588
        %647 = vst [vmem:[%s432 + $0x8] sm:$0xff] %v594
        %648 = vst [vmem:[%s432 + $0x10] sm:$0xff] %v600
        %649 = vst [vmem:[%s432 + $0x18] sm:$0xff] %v606
        %650 = vst [vmem:[%s432 + $0x20] sm:$0xff] %v612
        %651 = vst [vmem:[%s432 + $0x28] sm:$0xff] %v618
        %652 = vst [vmem:[%s432 + $0x30] sm:$0xff] %v624
        %653 = vst [vmem:[%s432 + $0x38] sm:$0xff] %v630
        %654 = vst [vmem:[%s432 + $0x40] sm:$0xff] %v636
        %655 = vst [vmem:[%s432 + $0x48] sm:$0xff] %v642
        %656 = vst [vmem:[%s446] sm:$0xff] %v590
        %657 = vst [vmem:[%s446 + $0x8] sm:$0xff] %v596
        %658 = vst [vmem:[%s446 + $0x10] sm:$0xff] %v602
        %659 = vst [vmem:[%s446 + $0x18] sm:$0xff] %v608
        %660 = vst [vmem:[%s446 + $0x20] sm:$0xff] %v614
        %661 = vst [vmem:[%s446 + $0x28] sm:$0xff] %v620
        %662 = vst [vmem:[%s446 + $0x30] sm:$0xff] %v626
        %663 = vst [vmem:[%s446 + $0x38] sm:$0xff] %v632
        %664 = vst [vmem:[%s446 + $0x40] sm:$0xff] %v638
        %665 = vst [vmem:[%s446 + $0x48] sm:$0xff] %v644
        %v666 = vld [vmem:[#allocation8] sm:$0xff]
        %v667 = vld [vmem:[#allocation8 + $0x8] sm:$0xff]
        %v668 = vld [vmem:[#allocation8 + $0x10] sm:$0xff]
        %v669 = vld [vmem:[#allocation8 + $0x18] sm:$0xff]
        %v670 = vld [vmem:[#allocation8 + $0x20] sm:$0xff]
        %v671 = vld [vmem:[#allocation8 + $0x28] sm:$0xff]
        %v672 = vld [vmem:[#allocation8 + $0x30] sm:$0xff]
        %v673 = vld [vmem:[#allocation8 + $0x38] sm:$0xff]
        %v674 = vld [vmem:[#allocation8 + $0x40] sm:$0xff]
        %v675 = vld [vmem:[#allocation8 + $0x48] sm:$0xff]
        %v676 = vld [vmem:[#allocation8 + $0x50] sm:$0xff]
        %v677 = vld [vmem:[#allocation8 + $0x58] sm:$0xff]
        %v678 = vld [vmem:[#allocation8 + $0x60] sm:$0xff]
        %v679 = vld [vmem:[#allocation8 + $0x68] sm:$0xff]
        %v680 = vld [vmem:[#allocation8 + $0x70] sm:$0xff]
        %v681 = vld [vmem:[#allocation8 + $0x78] sm:$0xff]
        %v682 = vld [vmem:[%s5] sm:$0x1]
        %v684 = vlaneseq
        %v685 = vshrl.u32 %v684, 7
        %v686 = vsub.s32 0, %v685
        %v687 = vrot.slane %v682, %v686
        %689 = vmatprep.subr.mxu0 0.0
        %690 = vmatpush1.msra.mxu0 %v666
        %691 = vmatprep.subr.mxu0 0.0
        %692 = vmatpush1.msra.mxu0 %v667
        %693 = vmatprep.subr.mxu0 0.0
        %694 = vmatpush1.msra.mxu0 %v668
        %695 = vmatprep.subr.mxu0 0.0
        %696 = vmatpush1.msra.mxu0 %v669
        %697 = vmatprep.subr.mxu0 0.0
        %698 = vmatpush1.msra.mxu0 %v670
        %699 = vmatprep.subr.mxu0 0.0
        %700 = vmatpush1.msra.mxu0 %v671
        %701 = vmatprep.subr.mxu0 0.0
        %702 = vmatpush1.msra.mxu0 %v672
        %703 = vmatprep.subr.mxu0 0.0
        %704 = vmatpush1.msra.mxu0 %v673
        %705 = vmatprep.subr.mxu0 0.0
        %706 = vmatpush1.msra.mxu0 %v674
        %707 = vmatprep.subr.mxu0 0.0
        %708 = vmatpush1.msra.mxu0 %v675
        %709 = vmatprep.subr.mxu0 0.0
        %710 = vmatpush1.msra.mxu0 %v676
        %711 = vmatprep.subr.mxu0 0.0
        %712 = vmatpush1.msra.mxu0 %v677
        %713 = vmatprep.subr.mxu0 0.0
        %714 = vmatpush1.msra.mxu0 %v678
        %715 = vmatprep.subr.mxu0 0.0
        %716 = vmatpush1.msra.mxu0 %v679
        %717 = vmatprep.subr.mxu0 0.0
        %718 = vmatpush1.msra.mxu0 %v680
        %719 = vmatprep.subr.mxu0 0.0
        %720 = vmatpush1.msra.mxu0 %v681
        %721 = vmatprep.subr.mxu0 0.0
        %722 = vmatpush1.msra.mxu0 0.0
        %723 = vmatprep.subr.mxu0 0.0
        %724 = vmatpush1.msra.mxu0 0.0
        %725 = vmatprep.subr.mxu0 0.0
        %726 = vmatpush1.msra.mxu0 0.0
        %727 = vmatprep.subr.mxu0 0.0
        %728 = vmatpush1.msra.mxu0 0.0
        %729 = vmatprep.subr.mxu0 0.0
        %730 = vmatpush1.msra.mxu0 0.0
        %731 = vmatprep.subr.mxu0 0.0
        %732 = vmatpush1.msra.mxu0 0.0
        %733 = vmatprep.subr.mxu0 0.0
        %734 = vmatpush1.msra.mxu0 0.0
        %735 = vmatprep.subr.mxu0 0.0
        %736 = vmatpush1.msra.mxu0 0.0
        %737 = vmatprep.subr.mxu0 0.0
        %738 = vmatpush1.msra.mxu0 0.0
        %739 = vmatprep.subr.mxu0 0.0
        %740 = vmatpush1.msra.mxu0 0.0
        %741 = vmatprep.subr.mxu0 0.0
        %742 = vmatpush1.msra.mxu0 0.0
        %743 = vmatprep.subr.mxu0 0.0
        %744 = vmatpush1.msra.mxu0 0.0
        %745 = vmatprep.subr.mxu0 0.0
        %746 = vmatpush1.msra.mxu0 0.0
        %747 = vmatprep.subr.mxu0 0.0
        %748 = vmatpush1.msra.mxu0 0.0
        %749 = vmatprep.subr.mxu0 0.0
        %750 = vmatpush1.msra.mxu0 0.0
        %751 = vmatprep.subr.mxu0 0.0
        %752 = vmatpush1.msra.mxu0 0.0
        %753 = vmatprep.mubr.f32.mxu0 0.0
        %754 = vmatmul.mubr.f32.gmra.mrb[0].mxu0 %v588
        %v755 = vpop.f32.mrb[0].mxu0
        %v756 = vadd.f32 %v687, %v755
        %v757 = vpop.f32.mrb[0].mxu0
        %758 = vmatprep.mubr.f32.mxu0 0.0
        %759 = vmatmul.mubr.f32.gmra.mrb[0].mxu0 %v594
        %v760 = vpop.f32.mrb[0].mxu0
        %v761 = vadd.f32 %v687, %v760
        %v762 = vpop.f32.mrb[0].mxu0
        %763 = vmatprep.mubr.f32.mxu0 0.0
        %764 = vmatmul.mubr.f32.gmra.mrb[0].mxu0 %v600
        %v765 = vpop.f32.mrb[0].mxu0
        %v766 = vadd.f32 %v687, %v765
        %v767 = vpop.f32.mrb[0].mxu0
        %768 = vmatprep.mubr.f32.mxu0 0.0
        %769 = vmatmul.mubr.f32.gmra.mrb[0].mxu0 %v606
        %v770 = vpop.f32.mrb[0].mxu0
        %v771 = vadd.f32 %v687, %v770
        %v772 = vpop.f32.mrb[0].mxu0
        %773 = vmatprep.mubr.f32.mxu0 0.0
        %774 = vmatmul.mubr.f32.gmra.mrb[0].mxu0 %v612
        %v775 = vpop.f32.mrb[0].mxu0
        %v776 = vadd.f32 %v687, %v775
        %v777 = vpop.f32.mrb[0].mxu0
        %778 = vmatprep.mubr.f32.mxu0 0.0
        %779 = vmatmul.mubr.f32.gmra.mrb[0].mxu0 %v618
        %v780 = vpop.f32.mrb[0].mxu0
        %v781 = vadd.f32 %v687, %v780
        %v782 = vpop.f32.mrb[0].mxu0
        %783 = vmatprep.mubr.f32.mxu0 0.0
        %784 = vmatmul.mubr.f32.gmra.mrb[0].mxu0 %v624
        %v785 = vpop.f32.mrb[0].mxu0
        %v786 = vadd.f32 %v687, %v785
        %v787 = vpop.f32.mrb[0].mxu0
        %788 = vmatprep.mubr.f32.mxu0 0.0
        %789 = vmatmul.mubr.f32.gmra.mrb[0].mxu0 %v630
        %v790 = vpop.f32.mrb[0].mxu0
        %v791 = vadd.f32 %v687, %v790
        %v792 = vpop.f32.mrb[0].mxu0
        %793 = vmatprep.mubr.f32.mxu0 0.0
        %794 = vmatmul.mubr.f32.gmra.mrb[0].mxu0 %v636
        %v795 = vpop.f32.mrb[0].mxu0
        %v796 = vadd.f32 %v687, %v795
        %v797 = vpop.f32.mrb[0].mxu0
        %798 = vmatprep.mubr.f32.mxu0 0.0
        %799 = vmatmul.mubr.f32.gmra.mrb[0].mxu0 %v642
        %v800 = vpop.f32.mrb[0].mxu0
        %v801 = vadd.f32 %v687, %v800
        %v802 = vpop.f32.mrb[0].mxu0
        %803 = vdwg.mxu0
        %s804 = sld [smem:[#allocation2]]
        %vm805 = vcmp.ge.f32.partialorder %v756, 0.0
        %vm806 = vcmp.ge.f32.partialorder %v761, 0.0
        %vm807 = vcmp.ge.f32.partialorder %v766, 0.0
        %vm808 = vcmp.ge.f32.partialorder %v771, 0.0
        %vm809 = vcmp.ge.f32.partialorder %v776, 0.0
        %vm810 = vcmp.ge.f32.partialorder %v781, 0.0
        %vm811 = vcmp.ge.f32.partialorder %v786, 0.0
        %vm812 = vcmp.ge.f32.partialorder %v791, 0.0
        %vm813 = vcmp.ge.f32.partialorder %v796, 0.0
        %vm814 = vcmp.ge.f32.partialorder %v801, 0.0
        %v815 = vstv %s804
        %v816 = vmul.f32 %v815, %v756
        %v817 = vmul.f32 %v815, %v761
        %v818 = vmul.f32 %v815, %v766
        %v819 = vmul.f32 %v815, %v771
        %v820 = vmul.f32 %v815, %v776
        %v821 = vmul.f32 %v815, %v781
        %v822 = vmul.f32 %v815, %v786
        %v823 = vmul.f32 %v815, %v791
        %v824 = vmul.f32 %v815, %v796
        %v825 = vmul.f32 %v815, %v801
        %v826 = vsel %vm805, %v756, %v816
        %v827 = vsel %vm806, %v761, %v817
        %v828 = vsel %vm807, %v766, %v818
        %v829 = vsel %vm808, %v771, %v819
        %v830 = vsel %vm809, %v776, %v820
        %v831 = vsel %vm810, %v781, %v821
        %v832 = vsel %vm811, %v786, %v822
        %v833 = vsel %vm812, %v791, %v823
        %v834 = vsel %vm813, %v796, %v824
        %v835 = vsel %vm814, %v801, %v825
        %v836 = vld [vmem:[#allocation9] sm:$0xff]
        %v837 = vld [vmem:[#allocation9 + $0x8] sm:$0xff]
        %v838 = vld [vmem:[#allocation9 + $0x10] sm:$0xff]
        %v839 = vld [vmem:[#allocation9 + $0x18] sm:$0xff]
        %v840 = vld [vmem:[#allocation9 + $0x20] sm:$0xff]
        %v841 = vld [vmem:[#allocation9 + $0x28] sm:$0xff]
        %v842 = vld [vmem:[#allocation9 + $0x30] sm:$0xff]
        %v843 = vld [vmem:[#allocation9 + $0x38] sm:$0xff]
        %v844 = vld [vmem:[#allocation9 + $0x40] sm:$0xff]
        %v845 = vld [vmem:[#allocation9 + $0x48] sm:$0xff]
        %v846 = vld [vmem:[#allocation9 + $0x50] sm:$0xff]
        %v847 = vld [vmem:[#allocation9 + $0x58] sm:$0xff]
        %v848 = vld [vmem:[#allocation9 + $0x60] sm:$0xff]
        %v849 = vld [vmem:[#allocation9 + $0x68] sm:$0xff]
        %v850 = vld [vmem:[#allocation9 + $0x70] sm:$0xff]
        %v851 = vld [vmem:[#allocation9 + $0x78] sm:$0xff]
        %v852 = vld [vmem:[%s7] sm:$0x1]
        %v854 = vlaneseq
        %v855 = vshrl.u32 %v854, 7
        %v856 = vsub.s32 0, %v855
        %v857 = vrot.slane %v852, %v856
        %859 = vmatprep.subr.mxu0 0.0
        %860 = vmatpush1.msra.mxu0 %v836
        %861 = vmatprep.subr.mxu0 0.0
        %862 = vmatpush1.msra.mxu0 %v837
        %863 = vmatprep.subr.mxu0 0.0
        %864 = vmatpush1.msra.mxu0 %v838
        %865 = vmatprep.subr.mxu0 0.0
        %866 = vmatpush1.msra.mxu0 %v839
        %867 = vmatprep.subr.mxu0 0.0
        %868 = vmatpush1.msra.mxu0 %v840
        %869 = vmatprep.subr.mxu0 0.0
        %870 = vmatpush1.msra.mxu0 %v841
        %871 = vmatprep.subr.mxu0 0.0
        %872 = vmatpush1.msra.mxu0 %v842
        %873 = vmatprep.subr.mxu0 0.0
        %874 = vmatpush1.msra.mxu0 %v843
        %875 = vmatprep.subr.mxu0 0.0
        %876 = vmatpush1.msra.mxu0 %v844
        %877 = vmatprep.subr.mxu0 0.0
        %878 = vmatpush1.msra.mxu0 %v845
        %879 = vmatprep.subr.mxu0 0.0
        %880 = vmatpush1.msra.mxu0 %v846
        %881 = vmatprep.subr.mxu0 0.0
        %882 = vmatpush1.msra.mxu0 %v847
        %883 = vmatprep.subr.mxu0 0.0
        %884 = vmatpush1.msra.mxu0 %v848
        %885 = vmatprep.subr.mxu0 0.0
        %886 = vmatpush1.msra.mxu0 %v849
        %887 = vmatprep.subr.mxu0 0.0
        %888 = vmatpush1.msra.mxu0 %v850
        %889 = vmatprep.subr.mxu0 0.0
        %890 = vmatpush1.msra.mxu0 %v851
        %891 = vmatprep.subr.mxu0 0.0
        %892 = vmatpush1.msra.mxu0 0.0
        %893 = vmatprep.subr.mxu0 0.0
        %894 = vmatpush1.msra.mxu0 0.0
        %895 = vmatprep.subr.mxu0 0.0
        %896 = vmatpush1.msra.mxu0 0.0
        %897 = vmatprep.subr.mxu0 0.0
        %898 = vmatpush1.msra.mxu0 0.0
        %899 = vmatprep.subr.mxu0 0.0
        %900 = vmatpush1.msra.mxu0 0.0
        %901 = vmatprep.subr.mxu0 0.0
        %902 = vmatpush1.msra.mxu0 0.0
        %903 = vmatprep.subr.mxu0 0.0
        %904 = vmatpush1.msra.mxu0 0.0
        %905 = vmatprep.subr.mxu0 0.0
        %906 = vmatpush1.msra.mxu0 0.0
        %907 = vmatprep.subr.mxu0 0.0
        %908 = vmatpush1.msra.mxu0 0.0
        %909 = vmatprep.subr.mxu0 0.0
        %910 = vmatpush1.msra.mxu0 0.0
        %911 = vmatprep.subr.mxu0 0.0
        %912 = vmatpush1.msra.mxu0 0.0
        %913 = vmatprep.subr.mxu0 0.0
        %914 = vmatpush1.msra.mxu0 0.0
        %915 = vmatprep.subr.mxu0 0.0
        %916 = vmatpush1.msra.mxu0 0.0
        %917 = vmatprep.subr.mxu0 0.0
        %918 = vmatpush1.msra.mxu0 0.0
        %919 = vmatprep.subr.mxu0 0.0
        %920 = vmatpush1.msra.mxu0 0.0
        %921 = vmatprep.subr.mxu0 0.0
        %922 = vmatpush1.msra.mxu0 0.0
        %923 = vmatprep.mubr.f32.mxu0 0.0
        %924 = vmatmul.mubr.f32.gmra.mrb[0].mxu0 %v826
        %v925 = vpop.f32.mrb[0].mxu0
        %v926 = vadd.f32 %v857, %v925
        %v927 = vpop.f32.mrb[0].mxu0
        %928 = vmatprep.mubr.f32.mxu0 0.0
        %929 = vmatmul.mubr.f32.gmra.mrb[0].mxu0 %v827
        %v930 = vpop.f32.mrb[0].mxu0
        %v931 = vadd.f32 %v857, %v930
        %v932 = vpop.f32.mrb[0].mxu0
        %933 = vmatprep.mubr.f32.mxu0 0.0
        %934 = vmatmul.mubr.f32.gmra.mrb[0].mxu0 %v828
        %v935 = vpop.f32.mrb[0].mxu0
        %v936 = vadd.f32 %v857, %v935
        %v937 = vpop.f32.mrb[0].mxu0
        %938 = vmatprep.mubr.f32.mxu0 0.0
        %939 = vmatmul.mubr.f32.gmra.mrb[0].mxu0 %v829
        %v940 = vpop.f32.mrb[0].mxu0
        %v941 = vadd.f32 %v857, %v940
        %v942 = vpop.f32.mrb[0].mxu0
        %943 = vmatprep.mubr.f32.mxu0 0.0
        %944 = vmatmul.mubr.f32.gmra.mrb[0].mxu0 %v830
        %v945 = vpop.f32.mrb[0].mxu0
        %v946 = vadd.f32 %v857, %v945
        %v947 = vpop.f32.mrb[0].mxu0
        %948 = vmatprep.mubr.f32.mxu0 0.0
        %949 = vmatmul.mubr.f32.gmra.mrb[0].mxu0 %v831
        %v950 = vpop.f32.mrb[0].mxu0
        %v951 = vadd.f32 %v857, %v950
        %v952 = vpop.f32.mrb[0].mxu0
        %953 = vmatprep.mubr.f32.mxu0 0.0
        %954 = vmatmul.mubr.f32.gmra.mrb[0].mxu0 %v832
        %v955 = vpop.f32.mrb[0].mxu0
        %v956 = vadd.f32 %v857, %v955
        %v957 = vpop.f32.mrb[0].mxu0
        %958 = vmatprep.mubr.f32.mxu0 0.0
        %959 = vmatmul.mubr.f32.gmra.mrb[0].mxu0 %v833
        %v960 = vpop.f32.mrb[0].mxu0
        %v961 = vadd.f32 %v857, %v960
        %v962 = vpop.f32.mrb[0].mxu0
        %963 = vmatprep.mubr.f32.mxu0 0.0
        %964 = vmatmul.mubr.f32.gmra.mrb[0].mxu0 %v834
        %v965 = vpop.f32.mrb[0].mxu0
        %v966 = vadd.f32 %v857, %v965
        %v967 = vpop.f32.mrb[0].mxu0
        %968 = vmatprep.mubr.f32.mxu0 0.0
        %969 = vmatmul.mubr.f32.gmra.mrb[0].mxu0 %v835
        %v970 = vpop.f32.mrb[0].mxu0
        %v971 = vadd.f32 %v857, %v970
        %v972 = vpop.f32.mrb[0].mxu0
        %973 = vdwg.mxu0
        %974 = vst [vmem:[%s439] sm:$0xff] %v926
        %975 = vst [vmem:[%s439 + $0x8] sm:$0xff] %v931
        %976 = vst [vmem:[%s439 + $0x10] sm:$0xff] %v936
        %977 = vst [vmem:[%s439 + $0x18] sm:$0xff] %v941
        %978 = vst [vmem:[%s439 + $0x20] sm:$0xff] %v946
        %979 = vst [vmem:[%s439 + $0x28] sm:$0xff] %v951
        %980 = vst [vmem:[%s439 + $0x30] sm:$0xff] %v956
        %981 = vst [vmem:[%s439 + $0x38] sm:$0xff] %v961
        %982 = vst [vmem:[%s439 + $0x40] sm:$0xff] %v966
        %983 = vst [vmem:[%s439 + $0x48] sm:$0xff] %v971
        %s984 = sand.u32 %s215, 1
        %s985 = scalar_lea.sflag [#allocation5], %s984
        %s986 = sand.u32 %s215, 1
        %s987 = smul.addr %s986, 80
        %s988 = scalar_lea.vmem [#allocation11], %s987
        %s989 = sand.u32 %s34, 1
        %s990 = scalar_lea.sflag [#allocation13], %s989
        %s991 = sand.u32 %s241, 1
        %s992 = smul.addr %s991, 80
        %s993 = scalar_lea.vmem [#allocation12], %s992
        %s994 = sand.u32 %s34, 1
        %s995 = scalar_lea.sflag [#allocation13], %s994
        %s996 = sand.u32 %s267, 1
        %s997 = smul.addr %s996, 80
        %s998 = scalar_lea.vmem [#allocation14], %s997
        // Predicated region
        $region69: #{tpu_custom_call.1} parent=51 // pred_check
          %p999 = pneg %p225
        $region70: #{tpu_custom_call.1} parent=51 // pred_check_branch
          %1001 = sbr.rel (%p999) target = $region72
        $region71: #{tpu_custom_call.1} parent=51 // pred_region
          %s1002 = smul.u32 10, %s34
          %s1003 = ssub.s32 38, %s1002
          %p1004 = scmp.lt.s32.totalorder %s1003, 10
          %s1005 = scalar_select %p1004, %s1003, 10
          %s1006 = smul.u32 128, %s1005
          %s1008 = ssub.s32 1280, %s1006
          %1009 = vsyncadd %s985, %s1008
          %p1010 = scmp.ne.s32.totalorder 0, %s1006
          %s1011 = smul.addr %s1002, 128
          %s1012 = scalar_lea.hbm %s8, %s1011
          %s1013 = smul.u32 8, %s1005
          %s1014 = sshll.u32 %s988, 4
          %s1015 = int_to_ptr.vmem [resolvable:$true] %s1014
          %s1016 = sshll.u32 %s1013, 4
          %1020 = dma.vmem_to_hbm [thread:$0]  (%p1010), %s1015, %s1016, %s1012, %s985, 128, 128, 8
        $region72: #{tpu_custom_call.1} parent=51 // pred_fallthru
          _
        // Predicated region
        $region73: #{tpu_custom_call.1} parent=51 // pred_check
          %p1021 = pneg %p251
        $region74: #{tpu_custom_call.1} parent=51 // pred_check_branch
          %1023 = sbr.rel (%p1021) target = $region76
        $region75: #{tpu_custom_call.1} parent=51 // pred_region
          %s1024 = smul.u32 10, %s34
          %s1025 = ssub.s32 38, %s1024
          %p1026 = scmp.lt.s32.totalorder %s1025, 10
          %s1027 = scalar_select %p1026, %s1025, 10
          %s1028 = smul.u32 128, %s1027
          %s1030 = ssub.s32 1280, %s1028
          %1031 = vsyncadd %s990, %s1030
          %p1032 = scmp.ne.s32.totalorder 0, %s1028
          %s1033 = smul.addr %s1024, 128
          %s1034 = scalar_lea.hbm %s9, %s1033
          %s1035 = smul.u32 8, %s1027
          %s1036 = sshll.u32 %s993, 4
          %s1037 = int_to_ptr.vmem [resolvable:$true] %s1036
          %s1038 = sshll.u32 %s1035, 4
          %1042 = dma.vmem_to_hbm [thread:$0]  (%p1032), %s1037, %s1038, %s1034, %s990, 128, 128, 8
        $region76: #{tpu_custom_call.1} parent=51 // pred_fallthru
          _
        // Predicated region
        $region77: #{tpu_custom_call.1} parent=51 // pred_check
          %p1043 = pneg %p277
        $region78: #{tpu_custom_call.1} parent=51 // pred_check_branch
          %1045 = sbr.rel (%p1043) target = $region80
        $region79: #{tpu_custom_call.1} parent=51 // pred_region
          %s1046 = smul.u32 10, %s34
          %s1047 = ssub.s32 38, %s1046
          %p1048 = scmp.lt.s32.totalorder %s1047, 10
          %s1049 = scalar_select %p1048, %s1047, 10
          %s1050 = smul.u32 128, %s1049
          %s1052 = ssub.s32 1280, %s1050
          %1053 = vsyncadd %s995, %s1052
          %p1054 = scmp.ne.s32.totalorder 0, %s1050
          %s1055 = smul.addr %s1046, 128
          %s1056 = scalar_lea.hbm %s10, %s1055
          %s1057 = smul.u32 8, %s1049
          %s1058 = sshll.u32 %s998, 4
          %s1059 = int_to_ptr.vmem [resolvable:$true] %s1058
          %s1060 = sshll.u32 %s1057, 4
          %1064 = dma.vmem_to_hbm [thread:$0]  (%p1054), %s1059, %s1060, %s1056, %s995, 128, 128, 8
        $region80: #{tpu_custom_call.1} parent=51 // pred_fallthru
          _
      $region52: #{tpu_custom_call.1} parent=5 // pred_fallthru
        _
      %p1065 = scmp.le.s32.totalorder 2, %s29
      // Predicated region
      $region81: #{tpu_custom_call.1} parent=5 // pred_check
        %p1066 = pneg %p1065
      $region82: #{tpu_custom_call.1} parent=5 // pred_check_branch
        %1068 = sbr.rel (%p1066) target = $region84
      $region83: #{tpu_custom_call.1} parent=5 // pred_region
        %s1069 = ssub.s32 %s29, 2
        // Predicated region
        $region85: #{tpu_custom_call.1} parent=83 // pred_check
          %p1070 = pneg %p231
        $region86: #{tpu_custom_call.1} parent=83 // pred_check_branch
          %1072 = sbr.rel (%p1070) target = $region88
        $region87: #{tpu_custom_call.1} parent=83 // pred_region
          %s1073 = sand.u32 %s216, 1
          %s1074 = scalar_lea.sflag [#allocation5], %s1073
          %s1075 = sand.u32 %s216, 1
          %s1076 = smul.addr %s1075, 80
          %s1077 = scalar_lea.vmem [#allocation11], %s1076
          %1078 = dma.done %s1074, 1280
        $region88: #{tpu_custom_call.1} parent=83 // pred_fallthru
          _
        // Predicated region
        $region89: #{tpu_custom_call.1} parent=83 // pred_check
          %p1079 = pneg %p257
        $region90: #{tpu_custom_call.1} parent=83 // pred_check_branch
          %1081 = sbr.rel (%p1079) target = $region92
        $region91: #{tpu_custom_call.1} parent=83 // pred_region
          %s1082 = sand.u32 %s35, 1
          %s1083 = scalar_lea.sflag [#allocation13], %s1082
          %s1084 = sand.u32 %s242, 1
          %s1085 = smul.addr %s1084, 80
          %s1086 = scalar_lea.vmem [#allocation12], %s1085
          %1087 = dma.done %s1083, 1280
        $region92: #{tpu_custom_call.1} parent=83 // pred_fallthru
          _
        // Predicated region
        $region93: #{tpu_custom_call.1} parent=83 // pred_check
          %p1088 = pneg %p283
        $region94: #{tpu_custom_call.1} parent=83 // pred_check_branch
          %1090 = sbr.rel (%p1088) target = $region96
        $region95: #{tpu_custom_call.1} parent=83 // pred_region
          %s1091 = sand.u32 %s35, 1
          %s1092 = scalar_lea.sflag [#allocation13], %s1091
          %s1093 = sand.u32 %s268, 1
          %s1094 = smul.addr %s1093, 80
          %s1095 = scalar_lea.vmem [#allocation14], %s1094
          %1096 = dma.done %s1092, 1280
        $region96: #{tpu_custom_call.1} parent=83 // pred_fallthru
          _
      $region84: #{tpu_custom_call.1} parent=5 // pred_fallthru
        _
    $region6: #{tpu_custom_call.1} parent=1 // loop_footer
      %s33 = sadd.s32 1, %s29
    $region7: #{tpu_custom_call.1} parent=1 // loop_footer_branch
      %28 = sbr.rel target = $region3
    $region8: #{tpu_custom_call.1} parent=1 // loop_exit
      _
    %1097 = vsyncpa [#allocation4], 1
    %s1098 = scalar_lea.sflag [#allocation4], 1
    %1099 = vsyncpa %s1098, 1
    %1100 = vsyncpa [#allocation7], 1
    %1101 = vsyncpa [#allocation10], 1
    %1102 = vsyncpa [#allocation5], 1
    %s1103 = scalar_lea.sflag [#allocation5], 1
    %1104 = vsyncpa %s1103, 1
    %1105 = vsyncpa [#allocation13], 1
    %s1106 = scalar_lea.sflag [#allocation13], 1
    %1107 = vsyncpa %s1106, 1

</llo_original>
